<compile_context>
chip_gen: v6e
topology: v6e:2x2x1
jax: 0.10.0
libtpu: 0.0.40
codegen_flags: <defaults>
</compile_context>

<pallas_src>
import functools

import jax
import jax.numpy as jnp
from jax.experimental import pallas as pl
from jax.experimental.pallas import tpu as pltpu


# ---------------------------------------------------------------------------
# Packed-parameter layout (rows x 128 lanes, all offsets multiples of 8).
#   L1 W[16,2]   rows   0.. 16     L4 W[64,128]  rows 208..272
#   L2 W[64,16]  rows  16.. 80     L5 W[16,64]   rows 272..288
#   L3 W[128,64] rows  80..208     L6 W^T[16,1]  rows 288..304
# Biases use the same row offsets in a [_PACK_ROWS, 1] f32 buffer.
# ---------------------------------------------------------------------------
_DIMS = (2, 16, 64, 128, 64, 16, 1)
_ROW_OFFS = (0, 16, 80, 208, 272, 288)
_PACK_ROWS = 304


def _round_up(n, m):
    return ((n + m - 1) // m) * m


def _vpu_has_bf16():
    """True on chips whose VPU is bf16-native (v6e / v7x)."""
    try:
        kind = jax.devices()[0].device_kind.lower()
    except Exception:
        return True
    return not any(tag in kind for tag in ("v2", "v3", "v4", "v5"))


def pack_params(params, mxu_dtype=jnp.bfloat16):
    """Pack the 6 (W [out,in], b [out,1]) pairs into two aligned buffers:
    weights cast ONCE to `mxu_dtype`, biases kept f32.  The final 1x16 weight
    is stored transposed ([16,1]) for the VPU epilogue."""
    w_buf = jnp.zeros((_PACK_ROWS, 128), jnp.float32)
    b_buf = jnp.zeros((_PACK_ROWS, 1), jnp.float32)
    for i, (w, b) in enumerate(params):
        out_d, in_d = w.shape
        off = _ROW_OFFS[i]
        w32 = jnp.asarray(w, jnp.float32)
        if i == len(params) - 1:                       # last layer: store W^T
            w_buf = w_buf.at[off:off + in_d, 0:out_d].set(w32.T)
        else:
            w_buf = w_buf.at[off:off + out_d, 0:in_d].set(w32)
        b_buf = b_buf.at[off:off + out_d, 0:1].set(
            jnp.asarray(b, jnp.float32).reshape(out_d, 1))
    return w_buf.astype(mxu_dtype), b_buf


def _mlp_kernel(x_ref, w_ref, b_ref, o_ref, *, mxu_dtype, tail_dtype):
    """Fused 6-layer MLP, feature-major ([features, batch_tile]) layout."""
    f32 = jnp.float32
    x = x_ref[...].astype(f32)                                    # [2, B]

    # ---- layer 1 (2 -> 16): two broadcast FMAs on the VPU (a K=2 MXU pass
    # would be almost entirely padding).
    w1 = w_ref[0:16, 0:2].astype(f32)                             # [16, 2]
    b1 = b_ref[0:16, :]                                           # [16, 1]
    h = w1[:, 0:1] * x[0:1, :] + w1[:, 1:2] * x[1:2, :] + b1
    h = jnp.maximum(h, 0.0).astype(mxu_dtype)                     # [16, B]

    def layer(h, off, out_d, in_d):
        w = w_ref[off:off + out_d, 0:in_d]                        # mxu_dtype
        b = b_ref[off:off + out_d, :].astype(tail_dtype)          # [out, 1]
        acc = jnp.dot(w, h, preferred_element_type=f32)           # f32 [out,B]
        return jnp.maximum(acc.astype(tail_dtype) + b, 0).astype(mxu_dtype)

    h = layer(h, 16, 64, 16)                                      # [64,  B]
    h = layer(h, 80, 128, 64)                                     # [128, B]
    h = layer(h, 208, 64, 128)                                    # [64,  B]
    h = layer(h, 272, 16, 64)                                     # [16,  B]

    # ---- layer 6 (16 -> 1): VPU weighted sum over 16 sublanes (avoids an
    # M=1 MXU pass + result-FIFO drain).  Weight was stored transposed.
    w6 = w_ref[288:304, 0:1].astype(f32)                          # [16, 1]
    b6 = b_ref[288:289, :]                                        # [1, 1]
    out = jnp.sum(h.astype(f32) * w6, axis=0, keepdims=True) + b6
    o_ref[...] = jnp.tanh(out).astype(o_ref.dtype)                # [1, B]


@functools.partial(jax.jit,
                   static_argnames=("feature_major", "batch_tile", "bf16_tail"))
def _forward_impl(x, w_packed, b_packed, *, feature_major, batch_tile, bf16_tail):
    if not feature_major:
        # TODO(synk): prefer a feature-major ([2, N]) producer; this transpose
        # is one extra HBM round trip over the input (it at least fuses with
        # the pad inside this jit).
        x = x.T
    d, n = x.shape
    assert d == 2

    # Tile: big enough to amortize per-step overhead, but never much larger
    # than the (128-aligned) problem, and always a multiple of 128.
    bt = max(128, min(int(batch_tile), _round_up(n, 128)))
    n_pad = _round_up(n, bt)
    if n_pad != n:
        x = jnp.pad(x, ((0, 0), (0, n_pad - n)))

    mxu_dtype = jnp.bfloat16 if w_packed.dtype == jnp.bfloat16 else jnp.float32
    tail_dtype = jnp.bfloat16 if (bf16_tail and mxu_dtype == jnp.bfloat16) \
        else jnp.float32

    # VMEM budget: live activations are ~sum(dims) rows per batch column; give
    # 2x headroom + fixed slack, cap at 48 MiB so v7x (64 MiB/TC) stays safe.
    act_bytes = 2 if mxu_dtype == jnp.bfloat16 else 4
    est = 2 * sum(_DIMS) * bt * act_bytes + (6 << 20)
    vmem_limit = int(min(max(32 << 20, est), 48 << 20))

    kernel = functools.partial(_mlp_kernel, mxu_dtype=mxu_dtype,
                               tail_dtype=tail_dtype)

    out = pl.pallas_call(
        kernel,
        out_shape=jax.ShapeDtypeStruct((1, n_pad), jnp.float32),
        grid_spec=pltpu.PrefetchScalarGridSpec(
            num_scalar_prefetch=0,
            grid=(n_pad // bt,),
            in_specs=[
                pl.BlockSpec((2, bt), lambda i: (0, i)),           # x slab
                pl.BlockSpec((_PACK_ROWS, 128), lambda i: (0, 0)),  # weights
                pl.BlockSpec((_PACK_ROWS, 1), lambda i: (0, 0)),    # biases
            ],
            out_specs=pl.BlockSpec((1, bt), lambda i: (0, i)),      # lane-dense
        ),
        compiler_params=pltpu.CompilerParams(
            dimension_semantics=("parallel",),
            vmem_limit_bytes=vmem_limit),
    )(x, w_packed, b_packed)

    out = out[:, :n]                                   # [1, N]
    return out if feature_major else out.T             # [N, 1] row-major


def metanet_forward(x, params, *, batch_tile=4096, use_bf16=True, bf16_tail=None):
    """x: [N, 2] float32 -> [N, 1] float32 (same semantics as the nn.Module)."""
    if bf16_tail is None:
        bf16_tail = bool(use_bf16) and _vpu_has_bf16()
    w_p, b_p = pack_params(params, jnp.bfloat16 if use_bf16 else jnp.float32)
    return _forward_impl(x, w_p, b_p, feature_major=False,
                         batch_tile=int(batch_tile), bf16_tail=bool(bf16_tail))


def metanet_forward_feature_major(x_fm, params, *, batch_tile=4096,
                                  use_bf16=True, bf16_tail=None):
    """x_fm: [2, N] feature-major (no input transpose) -> [1, N] float32."""
    if bf16_tail is None:
        bf16_tail = bool(use_bf16) and _vpu_has_bf16()
    w_p, b_p = pack_params(params, jnp.bfloat16 if use_bf16 else jnp.float32)
    return _forward_impl(x_fm, w_p, b_p, feature_major=True,
                         batch_tile=int(batch_tile), bf16_tail=bool(bf16_tail))


def init_params(key):
    """PyTorch nn.Linear default init: W, b ~ U(-1/sqrt(fan_in), 1/sqrt(fan_in)).
    W stored [out, in], b stored [out, 1]."""
    dims = _DIMS
    params = []
    for i in range(len(dims) - 1):
        fan_in, fan_out = dims[i], dims[i + 1]
        key, kw, kb = jax.random.split(key, 3)
        bound = 1.0 / jnp.sqrt(jnp.float32(fan_in))
        w = jax.random.uniform(kw, (fan_out, fan_in), jnp.float32, -bound, bound)
        b = jax.random.uniform(kb, (fan_out, 1), jnp.float32, -bound, bound)
        params.append((w, b))
    return params


def reference_forward(x, params):
    h = x
    for i, (w, b) in enumerate(params):
        h = jnp.dot(h, w.T, precision=jax.lax.Precision.HIGHEST) + b.T
        h = jnp.maximum(h, 0.0) if i < len(params) - 1 else jnp.tanh(h)
    return h


if __name__ == "__main__":
    key = jax.random.PRNGKey(0)
    key, kx, kx2 = jax.random.split(key, 3)
    params = init_params(key)

    # Small batch (single 128-wide tile), exact-f32 path: strict tolerance.
    n = 8
    x = jax.random.normal(kx, (n, 2), jnp.float32)
    ref = reference_forward(x, params)
    out_f32 = jax.block_until_ready(metanet_forward(x, params, use_bf16=False))
    assert out_f32.shape == (n, 1)
    assert jnp.allclose(out_f32, ref, atol=1e-5, rtol=1e-5), "f32 mismatch (small)"

    # Default perf path (bf16 MXU inputs, packed params): loose tolerance.
    out_bf = jax.block_until_ready(metanet_forward(x, params))
    assert out_bf.shape == (n, 1)
    assert jnp.all(jnp.isfinite(out_bf))
    assert jnp.allclose(out_bf, ref, atol=1e-1, rtol=1e-1), "bf16 mismatch (small)"

    # Feature-major producer layout + multi-step parallel grid (2 tiles).
    n2 = 4096
    x2_fm = jax.random.normal(kx2, (2, n2), jnp.float32)      # already [2, N]
    ref2 = reference_forward(x2_fm.T, params)
    out2 = jax.block_until_ready(
        metanet_forward_feature_major(x2_fm, params, batch_tile=2048))
    assert out2.shape == (1, n2)
    assert jnp.allclose(out2.T, ref2, atol=1e-1, rtol=1e-1), "bf16 mismatch (tiled)"

    # Exact-f32 path on the tiled grid, strict tolerance.
    out3 = jax.block_until_ready(
        metanet_forward(x2_fm.T, params, batch_tile=2048, use_bf16=False))
    assert out3.shape == (n2, 1)
    assert jnp.allclose(out3, ref2, atol=1e-5, rtol=1e-5), "f32 mismatch (tiled)"

    print("KERNEL_OK")
</pallas_src>

<mosaic_0001>
module attributes {stable_mosaic.version = 11 : i64} {
  func.func @_mlp_kernel(%arg0: i32, %arg1: memref<2x128xf32, #tpu.memory_space<vmem>>, %arg2: memref<304x128xf32, #tpu.memory_space<vmem>>, %arg3: memref<304x1xf32, #tpu.memory_space<vmem>>, %arg4: memref<1x128xf32, #tpu.memory_space<vmem>>) attributes {dimension_semantics = [#tpu.dimension_semantics<parallel>], iteration_bounds = array<i64: 1>, scalar_prefetch = 0 : i64, scratch_operands = 0 : i64, tpu.core_type = #tpu.core_type<tc>, window_params = [{transform_indices = @transform_0, window_bounds = array<i64: 2, 128>}, {pipeline_mode = #tpu.pipeline_mode<synchronous>, transform_indices = @transform_1, window_bounds = array<i64: 304, 128>}, {pipeline_mode = #tpu.pipeline_mode<synchronous>, transform_indices = @transform_2, window_bounds = array<i64: 304, 1>}, {transform_indices = @transform_3, window_bounds = array<i64: 1, 128>}]} {
    %c0 = arith.constant 0 : index
    %c0_0 = arith.constant 0 : index
    %0 = vector.load %arg1[%c0, %c0_0] : memref<2x128xf32, #tpu.memory_space<vmem>>, vector<2x128xf32>
    %c0_1 = arith.constant 0 : index
    %c0_2 = arith.constant 0 : index
    %1 = vector.load %arg2[%c0_1, %c0_2] : memref<304x128xf32, #tpu.memory_space<vmem>>, vector<16x2xf32>
    %c0_3 = arith.constant 0 : index
    %c0_4 = arith.constant 0 : index
    %2 = vector.load %arg3[%c0_3, %c0_4] : memref<304x1xf32, #tpu.memory_space<vmem>>, vector<16x1xf32>
    %3 = vector.extract_strided_slice %1 {offsets = [0, 0], sizes = [16, 1], strides = [1, 1]} : vector<16x2xf32> to vector<16x1xf32>
    %4 = vector.extract_strided_slice %0 {offsets = [0, 0], sizes = [1, 128], strides = [1, 1]} : vector<2x128xf32> to vector<1x128xf32>
    %5 = vector.broadcast %3 : vector<16x1xf32> to vector<16x128xf32>
    %6 = vector.broadcast %4 : vector<1x128xf32> to vector<16x128xf32>
    %7 = arith.mulf %5, %6 : vector<16x128xf32>
    %8 = vector.extract_strided_slice %1 {offsets = [0, 1], sizes = [16, 1], strides = [1, 1]} : vector<16x2xf32> to vector<16x1xf32>
    %9 = vector.extract_strided_slice %0 {offsets = [1, 0], sizes = [1, 128], strides = [1, 1]} : vector<2x128xf32> to vector<1x128xf32>
    %10 = vector.broadcast %8 : vector<16x1xf32> to vector<16x128xf32>
    %11 = vector.broadcast %9 : vector<1x128xf32> to vector<16x128xf32>
    %12 = arith.mulf %10, %11 : vector<16x128xf32>
    %13 = arith.addf %7, %12 : vector<16x128xf32>
    %14 = vector.broadcast %2 : vector<16x1xf32> to vector<16x128xf32>
    %15 = arith.addf %13, %14 : vector<16x128xf32>
    %cst = arith.constant 0.000000e+00 : f32
    %16 = vector.broadcast %cst : f32 to vector<16x128xf32>
    %17 = arith.maximumf %15, %16 : vector<16x128xf32>
    %c16 = arith.constant 16 : index
    %c0_5 = arith.constant 0 : index
    %18 = vector.load %arg2[%c16, %c0_5] : memref<304x128xf32, #tpu.memory_space<vmem>>, vector<64x16xf32>
    %c16_6 = arith.constant 16 : index
    %c0_7 = arith.constant 0 : index
    %19 = vector.load %arg3[%c16_6, %c0_7] : memref<304x1xf32, #tpu.memory_space<vmem>>, vector<64x1xf32>
    %cst_8 = arith.constant dense<0.000000e+00> : vector<64x128xf32>
    %20 = tpu.matmul %18, %17, %cst_8 {dimension_numbers = #tpu.dot_dimension_numbers<[1], [0], [0], [1], [0, 0, 1, 1], [], []>} : vector<64x16xf32>, vector<16x128xf32>, vector<64x128xf32> -> vector<64x128xf32>
    %21 = vector.broadcast %19 : vector<64x1xf32> to vector<64x128xf32>
    %22 = arith.addf %20, %21 : vector<64x128xf32>
    %cst_9 = arith.constant 0.000000e+00 : f32
    %23 = vector.broadcast %cst_9 : f32 to vector<64x128xf32>
    %24 = arith.maximumf %22, %23 : vector<64x128xf32>
    %c80 = arith.constant 80 : index
    %c0_10 = arith.constant 0 : index
    %25 = vector.load %arg2[%c80, %c0_10] : memref<304x128xf32, #tpu.memory_space<vmem>>, vector<128x64xf32>
    %c80_11 = arith.constant 80 : index
    %c0_12 = arith.constant 0 : index
    %26 = vector.load %arg3[%c80_11, %c0_12] : memref<304x1xf32, #tpu.memory_space<vmem>>, vector<128x1xf32>
    %cst_13 = arith.constant dense<0.000000e+00> : vector<128x128xf32>
    %27 = tpu.matmul %25, %24, %cst_13 {dimension_numbers = #tpu.dot_dimension_numbers<[1], [0], [0], [1], [0, 0, 1, 1], [], []>} : vector<128x64xf32>, vector<64x128xf32>, vector<128x128xf32> -> vector<128x128xf32>
    %28 = vector.broadcast %26 : vector<128x1xf32> to vector<128x128xf32>
    %29 = arith.addf %27, %28 : vector<128x128xf32>
    %cst_14 = arith.constant 0.000000e+00 : f32
    %30 = vector.broadcast %cst_14 : f32 to vector<128x128xf32>
    %31 = arith.maximumf %29, %30 : vector<128x128xf32>
    %c208 = arith.constant 208 : index
    %c0_15 = arith.constant 0 : index
    %32 = vector.load %arg2[%c208, %c0_15] : memref<304x128xf32, #tpu.memory_space<vmem>>, vector<64x128xf32>
    %c208_16 = arith.constant 208 : index
    %c0_17 = arith.constant 0 : index
    %33 = vector.load %arg3[%c208_16, %c0_17] : memref<304x1xf32, #tpu.memory_space<vmem>>, vector<64x1xf32>
    %cst_18 = arith.constant dense<0.000000e+00> : vector<64x128xf32>
    %34 = tpu.matmul %32, %31, %cst_18 {dimension_numbers = #tpu.dot_dimension_numbers<[1], [0], [0], [1], [0, 0, 1, 1], [], []>} : vector<64x128xf32>, vector<128x128xf32>, vector<64x128xf32> -> vector<64x128xf32>
    %35 = vector.broadcast %33 : vector<64x1xf32> to vector<64x128xf32>
    %36 = arith.addf %34, %35 : vector<64x128xf32>
    %cst_19 = arith.constant 0.000000e+00 : f32
    %37 = vector.broadcast %cst_19 : f32 to vector<64x128xf32>
    %38 = arith.maximumf %36, %37 : vector<64x128xf32>
    %c272 = arith.constant 272 : index
    %c0_20 = arith.constant 0 : index
    %39 = vector.load %arg2[%c272, %c0_20] : memref<304x128xf32, #tpu.memory_space<vmem>>, vector<16x64xf32>
    %c272_21 = arith.constant 272 : index
    %c0_22 = arith.constant 0 : index
    %40 = vector.load %arg3[%c272_21, %c0_22] : memref<304x1xf32, #tpu.memory_space<vmem>>, vector<16x1xf32>
    %cst_23 = arith.constant dense<0.000000e+00> : vector<16x128xf32>
    %41 = tpu.matmul %39, %38, %cst_23 {dimension_numbers = #tpu.dot_dimension_numbers<[1], [0], [0], [1], [0, 0, 1, 1], [], []>} : vector<16x64xf32>, vector<64x128xf32>, vector<16x128xf32> -> vector<16x128xf32>
    %42 = vector.broadcast %40 : vector<16x1xf32> to vector<16x128xf32>
    %43 = arith.addf %41, %42 : vector<16x128xf32>
    %cst_24 = arith.constant 0.000000e+00 : f32
    %44 = vector.broadcast %cst_24 : f32 to vector<16x128xf32>
    %45 = arith.maximumf %43, %44 : vector<16x128xf32>
    %c288 = arith.constant 288 : index
    %c0_25 = arith.constant 0 : index
    %46 = vector.load %arg2[%c288, %c0_25] : memref<304x128xf32, #tpu.memory_space<vmem>>, vector<16x1xf32>
    %c288_26 = arith.constant 288 : index
    %c0_27 = arith.constant 0 : index
    %47 = vector.load %arg3[%c288_26, %c0_27] : memref<304x1xf32, #tpu.memory_space<vmem>>, vector<1x1xf32>
    %48 = vector.broadcast %46 : vector<16x1xf32> to vector<16x128xf32>
    %49 = arith.mulf %45, %48 : vector<16x128xf32>
    %cst_28 = arith.constant dense<0.000000e+00> : vector<128xf32>
    %50 = vector.multi_reduction <add>, %49, %cst_28 [0] : vector<16x128xf32> to vector<128xf32>
    %51 = vector.shape_cast %50 : vector<128xf32> to vector<1x128xf32>
    %52 = vector.broadcast %47 : vector<1x1xf32> to vector<1x128xf32>
    %53 = arith.addf %51, %52 : vector<1x128xf32>
    %54 = math.tanh %53 : vector<1x128xf32>
    %c0_29 = arith.constant 0 : index
    %c0_30 = arith.constant 0 : index
    %55 = vector.load %arg4[%c0_29, %c0_30] : memref<1x128xf32, #tpu.memory_space<vmem>>, vector<1x128xf32>
    tpu.vector_store %arg4[%c0_29, %c0_30], %54 {strides = array<i32>} : memref<1x128xf32, #tpu.memory_space<vmem>>, vector<1x128xf32>,
    return
  }
  func.func @transform_0(%arg0: i32) -> (i32, i32) {
    %c0_i32 = arith.constant 0 : i32
    %c0_i32_0 = arith.constant 0 : i32
    return %c0_i32, %arg0 : i32, i32
  }
  func.func @transform_1(%arg0: i32) -> (i32, i32) {
    %c0_i32 = arith.constant 0 : i32
    %c0_i32_0 = arith.constant 0 : i32
    %c0_i32_1 = arith.constant 0 : i32
    return %c0_i32, %c0_i32_0 : i32, i32
  }
  func.func @transform_2(%arg0: i32) -> (i32, i32) {
    %c0_i32 = arith.constant 0 : i32
    %c0_i32_0 = arith.constant 0 : i32
    %c0_i32_1 = arith.constant 0 : i32
    return %c0_i32, %c0_i32_0 : i32, i32
  }
  func.func @transform_3(%arg0: i32) -> (i32, i32) {
    %c0_i32 = arith.constant 0 : i32
    %c0_i32_0 = arith.constant 0 : i32
    return %c0_i32, %arg0 : i32, i32
  }
}

</mosaic_0001>

<llo_original>
// kernel: _forward_impl.1
$region0: #{_forward_impl.1}
  #allocation0 [shape = 'u32[]', space=smem, size = 0x4, offset = 0x4, fixed_abs, tag = 'smem constant byte address 0x4 - core index']
  #allocation1 [shape = 'u32[144,128]{1,0:T(1,128)}', space=vmem, size = 0x12000, scoped, tag = 'internal scratch']
  %s0 = inlined_call_operand.vmem [shape: f32[2,128], index: 0, kind: input, shape index: {}]
  %s1 = inlined_call_operand.vmem [shape: f32[304,128], index: 1, kind: input, shape index: {}]
  %s2 = inlined_call_operand.vmem [shape: f32[304,1], index: 2, kind: input, shape index: {}]
  %s3 = inlined_call_operand.vmem [shape: f32[1,128], index: 3, kind: output, shape index: {}]
  %s4 = sld [smem:[#allocation0]]
  $region22: #{_forward_impl.1} parent=0
    _
  %s6 = ssub.s32 1, %s4
  %s7 = scalar_select 0, %s6, %s4
  // Predicated region
  $region2: #{_forward_impl.1} parent=0 // pred_check
    _
  $region3: #{_forward_impl.1} parent=0 // pred_check_branch
    %9 = sbr.rel (0) target = $region5
  $region4: #{_forward_impl.1} parent=0 // pred_region
    _
  $region5: #{_forward_impl.1} parent=0 // pred_fallthru
    _
  // Predicated region
  $region6: #{_forward_impl.1} parent=0 // pred_check
    _
  $region7: #{_forward_impl.1} parent=0 // pred_check_branch
    %11 = sbr.rel (0) target = $region9
  $region8: #{_forward_impl.1} parent=0 // pred_region
    _
  $region9: #{_forward_impl.1} parent=0 // pred_fallthru
    _
  // Predicated region
  $region10: #{_forward_impl.1} parent=0 // pred_check
    _
  $region11: #{_forward_impl.1} parent=0 // pred_check_branch
    %13 = sbr.rel (0) target = $region13
  $region12: #{_forward_impl.1} parent=0 // pred_region
    _
  $region13: #{_forward_impl.1} parent=0 // pred_fallthru
    _
  %v14 = vld [vmem:[%s0] sm:$0x3]
  %v15 = vld [vmem:[%s1] sm:$0xff]
  %v16 = vld [vmem:[%s1 + $0x8] sm:$0xff]
  %v17 = vld [vmem:[%s2] sm:$0xff]
  %v18 = vld [vmem:[%s2 + $0x8] sm:$0xff]
  %20 = vset.pattern.permute.xlu0 0
  %21 = vperm.xlu0 %20, %v15
  %v22 = vpop.permute.xlu0 %21
  %25 = vset.pattern.permute.xlu0 0
  %26 = vperm.xlu0 %25, %v16
  %v27 = vpop.permute.xlu0 %26
  %v29 = vlaneseq
  %v30 = vshrl.u32 %v29, 7
  %v31 = vsub.s32 0, %v30
  %v32 = vrot.slane %v14, %v31
  %v33 = vmul.f32 %v22, %v32
  %v34 = vmul.f32 %v27, %v32
  %35 = vset.pattern.permute.xlu0 1
  %36 = vperm.xlu0 %35, %v15
  %v37 = vpop.permute.xlu0 %36
  %39 = vset.pattern.permute.xlu0 1
  %40 = vperm.xlu0 %39, %v16
  %v41 = vpop.permute.xlu0 %40
  %v43 = vlaneseq
  %v44 = vshrl.u32 %v43, 7
  %v45 = vsub.s32 1, %v44
  %v46 = vrot.slane %v14, %v45
  %v47 = vmul.f32 %v37, %v46
  %v48 = vmul.f32 %v41, %v46
  %v49 = vadd.f32 %v33, %v47
  %v50 = vadd.f32 %v34, %v48
  %52 = vset.pattern.permute.xlu0 0
  %53 = vperm.xlu0 %52, %v17
  %v54 = vpop.permute.xlu0 %53
  %57 = vset.pattern.permute.xlu0 0
  %58 = vperm.xlu0 %57, %v18
  %v59 = vpop.permute.xlu0 %58
  %v61 = vadd.f32 %v49, %v54
  %v62 = vadd.f32 %v50, %v59
  %v63 = vmax.f32 %v61, 0.0
  %v64 = vmax.f32 %v62, 0.0
  %v65 = vld [vmem:[%s1 + $0x10] sm:$0xff]
  %v66 = vld [vmem:[%s1 + $0x18] sm:$0xff]
  %v67 = vld [vmem:[%s1 + $0x20] sm:$0xff]
  %v68 = vld [vmem:[%s1 + $0x28] sm:$0xff]
  %v69 = vld [vmem:[%s1 + $0x30] sm:$0xff]
  %v70 = vld [vmem:[%s1 + $0x38] sm:$0xff]
  %v71 = vld [vmem:[%s1 + $0x40] sm:$0xff]
  %v72 = vld [vmem:[%s1 + $0x48] sm:$0xff]
  %v73 = vld [vmem:[%s2 + $0x10] sm:$0xff]
  %v74 = vld [vmem:[%s2 + $0x18] sm:$0xff]
  %v75 = vld [vmem:[%s2 + $0x20] sm:$0xff]
  %v76 = vld [vmem:[%s2 + $0x28] sm:$0xff]
  %v77 = vld [vmem:[%s2 + $0x30] sm:$0xff]
  %v78 = vld [vmem:[%s2 + $0x38] sm:$0xff]
  %v79 = vld [vmem:[%s2 + $0x40] sm:$0xff]
  %v80 = vld [vmem:[%s2 + $0x48] sm:$0xff]
  %82 = vset.pattern.permute.xlu0 0
  %83 = vperm.xlu0 %82, %v73
  %v84 = vpop.permute.xlu0 %83
  %87 = vset.pattern.permute.xlu0 0
  %88 = vperm.xlu0 %87, %v74
  %v89 = vpop.permute.xlu0 %88
  %92 = vset.pattern.permute.xlu0 0
  %93 = vperm.xlu0 %92, %v75
  %v94 = vpop.permute.xlu0 %93
  %97 = vset.pattern.permute.xlu0 0
  %98 = vperm.xlu0 %97, %v76
  %v99 = vpop.permute.xlu0 %98
  %102 = vset.pattern.permute.xlu0 0
  %103 = vperm.xlu0 %102, %v77
  %v104 = vpop.permute.xlu0 %103
  %107 = vset.pattern.permute.xlu0 0
  %108 = vperm.xlu0 %107, %v78
  %v109 = vpop.permute.xlu0 %108
  %112 = vset.pattern.permute.xlu0 0
  %113 = vperm.xlu0 %112, %v79
  %v114 = vpop.permute.xlu0 %113
  %117 = vset.pattern.permute.xlu0 0
  %118 = vperm.xlu0 %117, %v80
  %v119 = vpop.permute.xlu0 %118
  %vm121 = vcmask 130048
  %v123 = vsel %vm121, %v65, 0
  %v126 = vsel %vm121, %v66, 0
  %v129 = vsel %vm121, %v67, 0
  %v132 = vsel %vm121, %v68, 0
  %v135 = vsel %vm121, %v69, 0
  %v138 = vsel %vm121, %v70, 0
  %v141 = vsel %vm121, %v71, 0
  %v144 = vsel %vm121, %v72, 0
  %146 = vmatprep.subr.mxu0 0.0
  %147 = vmatpush1.msra.mxu0 0.0
  %148 = vmatprep.subr.mxu0 0.0
  %149 = vmatpush1.msra.mxu0 0.0
  %150 = vmatprep.subr.mxu0 0.0
  %151 = vmatpush1.msra.mxu0 0.0
  %152 = vmatprep.subr.mxu0 0.0
  %153 = vmatpush1.msra.mxu0 0.0
  %154 = vmatprep.subr.mxu0 0.0
  %155 = vmatpush1.msra.mxu0 0.0
  %156 = vmatprep.subr.mxu0 0.0
  %157 = vmatpush1.msra.mxu0 0.0
  %158 = vmatprep.subr.mxu0 0.0
  %159 = vmatpush1.msra.mxu0 0.0
  %160 = vmatprep.subr.mxu0 0.0
  %161 = vmatpush1.msra.mxu0 0.0
  %162 = vmatprep.subr.mxu0 0.0
  %163 = vmatpush1.msra.mxu0 0.0
  %164 = vmatprep.subr.mxu0 0.0
  %165 = vmatpush1.msra.mxu0 0.0
  %166 = vmatprep.subr.mxu0 0.0
  %167 = vmatpush1.msra.mxu0 0.0
  %168 = vmatprep.subr.mxu0 0.0
  %169 = vmatpush1.msra.mxu0 0.0
  %170 = vmatprep.subr.mxu0 0.0
  %171 = vmatpush1.msra.mxu0 0.0
  %172 = vmatprep.subr.mxu0 0.0
  %173 = vmatpush1.msra.mxu0 0.0
  %174 = vmatprep.subr.mxu0 0.0
  %175 = vmatpush1.msra.mxu0 %v64
  %176 = vmatprep.subr.mxu0 0.0
  %177 = vmatpush1.msra.mxu0 %v63
  %178 = vmatprep.subr.mxu0 0.0
  %179 = vmatpush2.msra.mxu0 0.0
  %180 = vmatprep.subr.mxu0 0.0
  %181 = vmatpush2.msra.mxu0 0.0
  %182 = vmatprep.subr.mxu0 0.0
  %183 = vmatpush2.msra.mxu0 0.0
  %184 = vmatprep.subr.mxu0 0.0
  %185 = vmatpush2.msra.mxu0 0.0
  %186 = vmatprep.subr.mxu0 0.0
  %187 = vmatpush2.msra.mxu0 0.0
  %188 = vmatprep.subr.mxu0 0.0
  %189 = vmatpush2.msra.mxu0 0.0
  %190 = vmatprep.subr.mxu0 0.0
  %191 = vmatpush2.msra.mxu0 0.0
  %192 = vmatprep.subr.mxu0 0.0
  %193 = vmatpush2.msra.mxu0 0.0
  %194 = vmatprep.subr.mxu0 0.0
  %195 = vmatpush2.msra.mxu0 0.0
  %196 = vmatprep.subr.mxu0 0.0
  %197 = vmatpush2.msra.mxu0 0.0
  %198 = vmatprep.subr.mxu0 0.0
  %199 = vmatpush2.msra.mxu0 0.0
  %200 = vmatprep.subr.mxu0 0.0
  %201 = vmatpush2.msra.mxu0 0.0
  %202 = vmatprep.subr.mxu0 0.0
  %203 = vmatpush2.msra.mxu0 0.0
  %204 = vmatprep.subr.mxu0 0.0
  %205 = vmatpush2.msra.mxu0 0.0
  %206 = vmatprep.subr.mxu0 0.0
  %207 = vmatpush2.msra.mxu0 0.0
  %208 = vmatprep.subr.mxu0 0.0
  %209 = vmatpush2.msra.mxu0 0.0
  %210 = vmatprep.mubr.f32.mxu0 0.0
  %211 = vmatmul.mubr.f32.gmra.mxu0 %v123
  %v212 = vpop.f32.mrf.mxu0
  %v213 = vadd.f32 %v84, %v212
  %v214 = vpop.f32.mrf.mxu0
  %215 = vmatprep.mubr.f32.mxu0 0.0
  %216 = vmatmul.mubr.f32.gmra.mxu0 %v126
  %v217 = vpop.f32.mrf.mxu0
  %v218 = vadd.f32 %v89, %v217
  %v219 = vpop.f32.mrf.mxu0
  %220 = vmatprep.mubr.f32.mxu0 0.0
  %221 = vmatmul.mubr.f32.gmra.mxu0 %v129
  %v222 = vpop.f32.mrf.mxu0
  %v223 = vadd.f32 %v94, %v222
  %v224 = vpop.f32.mrf.mxu0
  %225 = vmatprep.mubr.f32.mxu0 0.0
  %226 = vmatmul.mubr.f32.gmra.mxu0 %v132
  %v227 = vpop.f32.mrf.mxu0
  %v228 = vadd.f32 %v99, %v227
  %v229 = vpop.f32.mrf.mxu0
  %230 = vmatprep.mubr.f32.mxu0 0.0
  %231 = vmatmul.mubr.f32.gmra.mxu0 %v135
  %v232 = vpop.f32.mrf.mxu0
  %v233 = vadd.f32 %v104, %v232
  %v234 = vpop.f32.mrf.mxu0
  %235 = vmatprep.mubr.f32.mxu0 0.0
  %236 = vmatmul.mubr.f32.gmra.mxu0 %v138
  %v237 = vpop.f32.mrf.mxu0
  %v238 = vadd.f32 %v109, %v237
  %v239 = vpop.f32.mrf.mxu0
  %240 = vmatprep.mubr.f32.mxu0 0.0
  %241 = vmatmul.mubr.f32.gmra.mxu0 %v141
  %v242 = vpop.f32.mrf.mxu0
  %v243 = vadd.f32 %v114, %v242
  %v244 = vpop.f32.mrf.mxu0
  %245 = vmatprep.mubr.f32.mxu0 0.0
  %246 = vmatmul.mubr.f32.gmra.mxu0 %v144
  %v247 = vpop.f32.mrf.mxu0
  %v248 = vadd.f32 %v119, %v247
  %v249 = vpop.f32.mrf.mxu0
  %250 = vdwg.mxu0
  %v251 = vmax.f32 %v213, 0.0
  %v252 = vmax.f32 %v218, 0.0
  %v253 = vmax.f32 %v223, 0.0
  %v254 = vmax.f32 %v228, 0.0
  %v255 = vmax.f32 %v233, 0.0
  %v256 = vmax.f32 %v238, 0.0
  %v257 = vmax.f32 %v243, 0.0
  %v258 = vmax.f32 %v248, 0.0
  %v259 = vld [vmem:[%s1 + $0x50] sm:$0xff]
  %v260 = vld [vmem:[%s1 + $0x58] sm:$0xff]
  %v261 = vld [vmem:[%s1 + $0x60] sm:$0xff]
  %v262 = vld [vmem:[%s1 + $0x68] sm:$0xff]
  %v263 = vld [vmem:[%s1 + $0x70] sm:$0xff]
  %v264 = vld [vmem:[%s1 + $0x78] sm:$0xff]
  %v265 = vld [vmem:[%s1 + $0x80] sm:$0xff]
  %v266 = vld [vmem:[%s1 + $0x88] sm:$0xff]
  %v267 = vld [vmem:[%s1 + $0x90] sm:$0xff]
  %v268 = vld [vmem:[%s1 + $0x98] sm:$0xff]
  %v269 = vld [vmem:[%s1 + $0xa0] sm:$0xff]
  %v270 = vld [vmem:[%s1 + $0xa8] sm:$0xff]
  %v271 = vld [vmem:[%s1 + $0xb0] sm:$0xff]
  %v272 = vld [vmem:[%s1 + $0xb8] sm:$0xff]
  %v273 = vld [vmem:[%s1 + $0xc0] sm:$0xff]
  %v274 = vld [vmem:[%s1 + $0xc8] sm:$0xff]
  %v275 = vld [vmem:[%s2 + $0x50] sm:$0xff]
  %v276 = vld [vmem:[%s2 + $0x58] sm:$0xff]
  %v277 = vld [vmem:[%s2 + $0x60] sm:$0xff]
  %v278 = vld [vmem:[%s2 + $0x68] sm:$0xff]
  %v279 = vld [vmem:[%s2 + $0x70] sm:$0xff]
  %v280 = vld [vmem:[%s2 + $0x78] sm:$0xff]
  %v281 = vld [vmem:[%s2 + $0x80] sm:$0xff]
  %v282 = vld [vmem:[%s2 + $0x88] sm:$0xff]
  %v283 = vld [vmem:[%s2 + $0x90] sm:$0xff]
  %v284 = vld [vmem:[%s2 + $0x98] sm:$0xff]
  %v285 = vld [vmem:[%s2 + $0xa0] sm:$0xff]
  %v286 = vld [vmem:[%s2 + $0xa8] sm:$0xff]
  %v287 = vld [vmem:[%s2 + $0xb0] sm:$0xff]
  %v288 = vld [vmem:[%s2 + $0xb8] sm:$0xff]
  %v289 = vld [vmem:[%s2 + $0xc0] sm:$0xff]
  %v290 = vld [vmem:[%s2 + $0xc8] sm:$0xff]
  %292 = vset.pattern.permute.xlu0 0
  %293 = vperm.xlu0 %292, %v275
  %v294 = vpop.permute.xlu0 %293
  %297 = vset.pattern.permute.xlu0 0
  %298 = vperm.xlu0 %297, %v276
  %v299 = vpop.permute.xlu0 %298
  %302 = vset.pattern.permute.xlu0 0
  %303 = vperm.xlu0 %302, %v277
  %v304 = vpop.permute.xlu0 %303
  %307 = vset.pattern.permute.xlu0 0
  %308 = vperm.xlu0 %307, %v278
  %v309 = vpop.permute.xlu0 %308
  %312 = vset.pattern.permute.xlu0 0
  %313 = vperm.xlu0 %312, %v279
  %v314 = vpop.permute.xlu0 %313
  %317 = vset.pattern.permute.xlu0 0
  %318 = vperm.xlu0 %317, %v280
  %v319 = vpop.permute.xlu0 %318
  %322 = vset.pattern.permute.xlu0 0
  %323 = vperm.xlu0 %322, %v281
  %v324 = vpop.permute.xlu0 %323
  %327 = vset.pattern.permute.xlu0 0
  %328 = vperm.xlu0 %327, %v282
  %v329 = vpop.permute.xlu0 %328
  %332 = vset.pattern.permute.xlu0 0
  %333 = vperm.xlu0 %332, %v283
  %v334 = vpop.permute.xlu0 %333
  %337 = vset.pattern.permute.xlu0 0
  %338 = vperm.xlu0 %337, %v284
  %v339 = vpop.permute.xlu0 %338
  %342 = vset.pattern.permute.xlu0 0
  %343 = vperm.xlu0 %342, %v285
  %v344 = vpop.permute.xlu0 %343
  %347 = vset.pattern.permute.xlu0 0
  %348 = vperm.xlu0 %347, %v286
  %v349 = vpop.permute.xlu0 %348
  %352 = vset.pattern.permute.xlu0 0
  %353 = vperm.xlu0 %352, %v287
  %v354 = vpop.permute.xlu0 %353
  %357 = vset.pattern.permute.xlu0 0
  %358 = vperm.xlu0 %357, %v288
  %v359 = vpop.permute.xlu0 %358
  %362 = vset.pattern.permute.xlu0 0
  %363 = vperm.xlu0 %362, %v289
  %v364 = vpop.permute.xlu0 %363
  %367 = vset.pattern.permute.xlu0 0
  %368 = vperm.xlu0 %367, %v290
  %v369 = vpop.permute.xlu0 %368
  %vm371 = vcmask 523264
  %v373 = vsel %vm371, %v259, 0
  %v376 = vsel %vm371, %v260, 0
  %v379 = vsel %vm371, %v261, 0
  %v382 = vsel %vm371, %v262, 0
  %v385 = vsel %vm371, %v263, 0
  %v388 = vsel %vm371, %v264, 0
  %v391 = vsel %vm371, %v265, 0
  %v394 = vsel %vm371, %v266, 0
  %v397 = vsel %vm371, %v267, 0
  %v400 = vsel %vm371, %v268, 0
  %v403 = vsel %vm371, %v269, 0
  %v406 = vsel %vm371, %v270, 0
  %v409 = vsel %vm371, %v271, 0
  %v412 = vsel %vm371, %v272, 0
  %v415 = vsel %vm371, %v273, 0
  %v418 = vsel %vm371, %v274, 0
  %420 = vmatprep.subr.mxu0 0.0
  %421 = vmatpush1.msra.mxu0 0.0
  %422 = vmatprep.subr.mxu0 0.0
  %423 = vmatpush1.msra.mxu0 0.0
  %424 = vmatprep.subr.mxu0 0.0
  %425 = vmatpush1.msra.mxu0 0.0
  %426 = vmatprep.subr.mxu0 0.0
  %427 = vmatpush1.msra.mxu0 0.0
  %428 = vmatprep.subr.mxu0 0.0
  %429 = vmatpush1.msra.mxu0 0.0
  %430 = vmatprep.subr.mxu0 0.0
  %431 = vmatpush1.msra.mxu0 0.0
  %432 = vmatprep.subr.mxu0 0.0
  %433 = vmatpush1.msra.mxu0 0.0
  %434 = vmatprep.subr.mxu0 0.0
  %435 = vmatpush1.msra.mxu0 0.0
  %436 = vmatprep.subr.mxu0 0.0
  %437 = vmatpush1.msra.mxu0 %v258
  %438 = vmatprep.subr.mxu0 0.0
  %439 = vmatpush1.msra.mxu0 %v257
  %440 = vmatprep.subr.mxu0 0.0
  %441 = vmatpush1.msra.mxu0 %v256
  %442 = vmatprep.subr.mxu0 0.0
  %443 = vmatpush1.msra.mxu0 %v255
  %444 = vmatprep.subr.mxu0 0.0
  %445 = vmatpush1.msra.mxu0 %v254
  %446 = vmatprep.subr.mxu0 0.0
  %447 = vmatpush1.msra.mxu0 %v253
  %448 = vmatprep.subr.mxu0 0.0
  %449 = vmatpush1.msra.mxu0 %v252
  %450 = vmatprep.subr.mxu0 0.0
  %451 = vmatpush1.msra.mxu0 %v251
  %452 = vmatprep.subr.mxu0 0.0
  %453 = vmatpush2.msra.mxu0 0.0
  %454 = vmatprep.subr.mxu0 0.0
  %455 = vmatpush2.msra.mxu0 0.0
  %456 = vmatprep.subr.mxu0 0.0
  %457 = vmatpush2.msra.mxu0 0.0
  %458 = vmatprep.subr.mxu0 0.0
  %459 = vmatpush2.msra.mxu0 0.0
  %460 = vmatprep.subr.mxu0 0.0
  %461 = vmatpush2.msra.mxu0 0.0
  %462 = vmatprep.subr.mxu0 0.0
  %463 = vmatpush2.msra.mxu0 0.0
  %464 = vmatprep.subr.mxu0 0.0
  %465 = vmatpush2.msra.mxu0 0.0
  %466 = vmatprep.subr.mxu0 0.0
  %467 = vmatpush2.msra.mxu0 0.0
  %468 = vmatprep.subr.mxu0 0.0
  %469 = vmatpush2.msra.mxu0 0.0
  %470 = vmatprep.subr.mxu0 0.0
  %471 = vmatpush2.msra.mxu0 0.0
  %472 = vmatprep.subr.mxu0 0.0
  %473 = vmatpush2.msra.mxu0 0.0
  %474 = vmatprep.subr.mxu0 0.0
  %475 = vmatpush2.msra.mxu0 0.0
  %476 = vmatprep.subr.mxu0 0.0
  %477 = vmatpush2.msra.mxu0 0.0
  %478 = vmatprep.subr.mxu0 0.0
  %479 = vmatpush2.msra.mxu0 0.0
  %480 = vmatprep.subr.mxu0 0.0
  %481 = vmatpush2.msra.mxu0 0.0
  %482 = vmatprep.subr.mxu0 0.0
  %483 = vmatpush2.msra.mxu0 0.0
  %484 = vmatprep.mubr.f32.mxu0 0.0
  %485 = vmatmul.mubr.f32.gmra.mxu0 %v373
  %v486 = vpop.f32.mrf.mxu0
  %v487 = vadd.f32 %v294, %v486
  %v488 = vpop.f32.mrf.mxu0
  %489 = vmatprep.mubr.f32.mxu0 0.0
  %490 = vmatmul.mubr.f32.gmra.mxu0 %v376
  %v491 = vpop.f32.mrf.mxu0
  %v492 = vadd.f32 %v299, %v491
  %v493 = vpop.f32.mrf.mxu0
  %494 = vmatprep.mubr.f32.mxu0 0.0
  %495 = vmatmul.mubr.f32.gmra.mxu0 %v379
  %v496 = vpop.f32.mrf.mxu0
  %v497 = vadd.f32 %v304, %v496
  %v498 = vpop.f32.mrf.mxu0
  %499 = vmatprep.mubr.f32.mxu0 0.0
  %500 = vmatmul.mubr.f32.gmra.mxu0 %v382
  %v501 = vpop.f32.mrf.mxu0
  %v502 = vadd.f32 %v309, %v501
  %v503 = vpop.f32.mrf.mxu0
  %504 = vmatprep.mubr.f32.mxu0 0.0
  %505 = vmatmul.mubr.f32.gmra.mxu0 %v385
  %v506 = vpop.f32.mrf.mxu0
  %v507 = vadd.f32 %v314, %v506
  %v508 = vpop.f32.mrf.mxu0
  %509 = vmatprep.mubr.f32.mxu0 0.0
  %510 = vmatmul.mubr.f32.gmra.mxu0 %v388
  %v511 = vpop.f32.mrf.mxu0
  %v512 = vadd.f32 %v319, %v511
  %v513 = vpop.f32.mrf.mxu0
  %514 = vmatprep.mubr.f32.mxu0 0.0
  %515 = vmatmul.mubr.f32.gmra.mxu0 %v391
  %v516 = vpop.f32.mrf.mxu0
  %v517 = vadd.f32 %v324, %v516
  %v518 = vpop.f32.mrf.mxu0
  %519 = vmatprep.mubr.f32.mxu0 0.0
  %520 = vmatmul.mubr.f32.gmra.mxu0 %v394
  %v521 = vpop.f32.mrf.mxu0
  %v522 = vadd.f32 %v329, %v521
  %v523 = vpop.f32.mrf.mxu0
  %524 = vmatprep.mubr.f32.mxu0 0.0
  %525 = vmatmul.mubr.f32.gmra.mxu0 %v397
  %v526 = vpop.f32.mrf.mxu0
  %v527 = vadd.f32 %v334, %v526
  %v528 = vpop.f32.mrf.mxu0
  %529 = vmatprep.mubr.f32.mxu0 0.0
  %530 = vmatmul.mubr.f32.gmra.mxu0 %v400
  %v531 = vpop.f32.mrf.mxu0
  %v532 = vadd.f32 %v339, %v531
  %v533 = vpop.f32.mrf.mxu0
  %534 = vmatprep.mubr.f32.mxu0 0.0
  %535 = vmatmul.mubr.f32.gmra.mxu0 %v403
  %v536 = vpop.f32.mrf.mxu0
  %v537 = vadd.f32 %v344, %v536
  %v538 = vpop.f32.mrf.mxu0
  %539 = vmatprep.mubr.f32.mxu0 0.0
  %540 = vmatmul.mubr.f32.gmra.mxu0 %v406
  %v541 = vpop.f32.mrf.mxu0
  %v542 = vadd.f32 %v349, %v541
  %v543 = vpop.f32.mrf.mxu0
  %544 = vmatprep.mubr.f32.mxu0 0.0
  %545 = vmatmul.mubr.f32.gmra.mxu0 %v409
  %v546 = vpop.f32.mrf.mxu0
  %v547 = vadd.f32 %v354, %v546
  %v548 = vpop.f32.mrf.mxu0
  %549 = vmatprep.mubr.f32.mxu0 0.0
  %550 = vmatmul.mubr.f32.gmra.mxu0 %v412
  %v551 = vpop.f32.mrf.mxu0
  %v552 = vadd.f32 %v359, %v551
  %v553 = vpop.f32.mrf.mxu0
  %554 = vmatprep.mubr.f32.mxu0 0.0
  %555 = vmatmul.mubr.f32.gmra.mxu0 %v415
  %v556 = vpop.f32.mrf.mxu0
  %v557 = vadd.f32 %v364, %v556
  %v558 = vpop.f32.mrf.mxu0
  %559 = vmatprep.mubr.f32.mxu0 0.0
  %560 = vmatmul.mubr.f32.gmra.mxu0 %v418
  %v561 = vpop.f32.mrf.mxu0
  %v562 = vadd.f32 %v369, %v561
  %v563 = vpop.f32.mrf.mxu0
  %564 = vdwg.mxu0
  %v565 = vmax.f32 %v487, 0.0
  %v566 = vmax.f32 %v492, 0.0
  %v567 = vmax.f32 %v497, 0.0
  %v568 = vmax.f32 %v502, 0.0
  %v569 = vmax.f32 %v507, 0.0
  %v570 = vmax.f32 %v512, 0.0
  %v571 = vmax.f32 %v517, 0.0
  %v572 = vmax.f32 %v522, 0.0
  %v573 = vmax.f32 %v527, 0.0
  %v574 = vmax.f32 %v532, 0.0
  %v575 = vmax.f32 %v537, 0.0
  %v576 = vmax.f32 %v542, 0.0
  %v577 = vmax.f32 %v547, 0.0
  %v578 = vmax.f32 %v552, 0.0
  %v579 = vmax.f32 %v557, 0.0
  %v580 = vmax.f32 %v562, 0.0
  %v581 = vld [vmem:[%s1 + $0xd0] sm:$0xff]
  %v582 = vld [vmem:[%s1 + $0xd8] sm:$0xff]
  %v583 = vld [vmem:[%s1 + $0xe0] sm:$0xff]
  %v584 = vld [vmem:[%s1 + $0xe8] sm:$0xff]
  %v585 = vld [vmem:[%s1 + $0xf0] sm:$0xff]
  %v586 = vld [vmem:[%s1 + $0xf8] sm:$0xff]
  %v587 = vld [vmem:[%s1 + $0x100] sm:$0xff]
  %v588 = vld [vmem:[%s1 + $0x108] sm:$0xff]
  %v589 = vld [vmem:[%s2 + $0xd0] sm:$0xff]
  %v590 = vld [vmem:[%s2 + $0xd8] sm:$0xff]
  %v591 = vld [vmem:[%s2 + $0xe0] sm:$0xff]
  %v592 = vld [vmem:[%s2 + $0xe8] sm:$0xff]
  %v593 = vld [vmem:[%s2 + $0xf0] sm:$0xff]
  %v594 = vld [vmem:[%s2 + $0xf8] sm:$0xff]
  %v595 = vld [vmem:[%s2 + $0x100] sm:$0xff]
  %v596 = vld [vmem:[%s2 + $0x108] sm:$0xff]
  %598 = vset.pattern.permute.xlu0 0
  %599 = vperm.xlu0 %598, %v589
  %v600 = vpop.permute.xlu0 %599
  %603 = vset.pattern.permute.xlu0 0
  %604 = vperm.xlu0 %603, %v590
  %v605 = vpop.permute.xlu0 %604
  %608 = vset.pattern.permute.xlu0 0
  %609 = vperm.xlu0 %608, %v591
  %v610 = vpop.permute.xlu0 %609
  %613 = vset.pattern.permute.xlu0 0
  %614 = vperm.xlu0 %613, %v592
  %v615 = vpop.permute.xlu0 %614
  %618 = vset.pattern.permute.xlu0 0
  %619 = vperm.xlu0 %618, %v593
  %v620 = vpop.permute.xlu0 %619
  %623 = vset.pattern.permute.xlu0 0
  %624 = vperm.xlu0 %623, %v594
  %v625 = vpop.permute.xlu0 %624
  %628 = vset.pattern.permute.xlu0 0
  %629 = vperm.xlu0 %628, %v595
  %v630 = vpop.permute.xlu0 %629
  %633 = vset.pattern.permute.xlu0 0
  %634 = vperm.xlu0 %633, %v596
  %v635 = vpop.permute.xlu0 %634
  %637 = vmatprep.subr.mxu0 0.0
  %638 = vmatpush1.msra.mxu0 %v580
  %639 = vmatprep.subr.mxu0 0.0
  %640 = vmatpush1.msra.mxu0 %v579
  %641 = vmatprep.subr.mxu0 0.0
  %642 = vmatpush1.msra.mxu0 %v578
  %643 = vmatprep.subr.mxu0 0.0
  %644 = vmatpush1.msra.mxu0 %v577
  %645 = vmatprep.subr.mxu0 0.0
  %646 = vmatpush1.msra.mxu0 %v576
  %647 = vmatprep.subr.mxu0 0.0
  %648 = vmatpush1.msra.mxu0 %v575
  %649 = vmatprep.subr.mxu0 0.0
  %650 = vmatpush1.msra.mxu0 %v574
  %651 = vmatprep.subr.mxu0 0.0
  %652 = vmatpush1.msra.mxu0 %v573
  %653 = vmatprep.subr.mxu0 0.0
  %654 = vmatpush1.msra.mxu0 %v572
  %655 = vmatprep.subr.mxu0 0.0
  %656 = vmatpush1.msra.mxu0 %v571
  %657 = vmatprep.subr.mxu0 0.0
  %658 = vmatpush1.msra.mxu0 %v570
  %659 = vmatprep.subr.mxu0 0.0
  %660 = vmatpush1.msra.mxu0 %v569
  %661 = vmatprep.subr.mxu0 0.0
  %662 = vmatpush1.msra.mxu0 %v568
  %663 = vmatprep.subr.mxu0 0.0
  %664 = vmatpush1.msra.mxu0 %v567
  %665 = vmatprep.subr.mxu0 0.0
  %666 = vmatpush1.msra.mxu0 %v566
  %667 = vmatprep.subr.mxu0 0.0
  %668 = vmatpush1.msra.mxu0 %v565
  %669 = vmatprep.subr.mxu0 0.0
  %670 = vmatpush2.msra.mxu0 0.0
  %671 = vmatprep.subr.mxu0 0.0
  %672 = vmatpush2.msra.mxu0 0.0
  %673 = vmatprep.subr.mxu0 0.0
  %674 = vmatpush2.msra.mxu0 0.0
  %675 = vmatprep.subr.mxu0 0.0
  %676 = vmatpush2.msra.mxu0 0.0
  %677 = vmatprep.subr.mxu0 0.0
  %678 = vmatpush2.msra.mxu0 0.0
  %679 = vmatprep.subr.mxu0 0.0
  %680 = vmatpush2.msra.mxu0 0.0
  %681 = vmatprep.subr.mxu0 0.0
  %682 = vmatpush2.msra.mxu0 0.0
  %683 = vmatprep.subr.mxu0 0.0
  %684 = vmatpush2.msra.mxu0 0.0
  %685 = vmatprep.subr.mxu0 0.0
  %686 = vmatpush2.msra.mxu0 0.0
  %687 = vmatprep.subr.mxu0 0.0
  %688 = vmatpush2.msra.mxu0 0.0
  %689 = vmatprep.subr.mxu0 0.0
  %690 = vmatpush2.msra.mxu0 0.0
  %691 = vmatprep.subr.mxu0 0.0
  %692 = vmatpush2.msra.mxu0 0.0
  %693 = vmatprep.subr.mxu0 0.0
  %694 = vmatpush2.msra.mxu0 0.0
  %695 = vmatprep.subr.mxu0 0.0
  %696 = vmatpush2.msra.mxu0 0.0
  %697 = vmatprep.subr.mxu0 0.0
  %698 = vmatpush2.msra.mxu0 0.0
  %699 = vmatprep.subr.mxu0 0.0
  %700 = vmatpush2.msra.mxu0 0.0
  %701 = vmatprep.mubr.f32.mxu0 0.0
  %702 = vmatmul.mubr.f32.gmra.mxu0 %v581
  %v703 = vpop.f32.mrf.mxu0
  %v704 = vadd.f32 %v600, %v703
  %v705 = vpop.f32.mrf.mxu0
  %706 = vmatprep.mubr.f32.mxu0 0.0
  %707 = vmatmul.mubr.f32.gmra.mxu0 %v582
  %v708 = vpop.f32.mrf.mxu0
  %v709 = vadd.f32 %v605, %v708
  %v710 = vpop.f32.mrf.mxu0
  %711 = vmatprep.mubr.f32.mxu0 0.0
  %712 = vmatmul.mubr.f32.gmra.mxu0 %v583
  %v713 = vpop.f32.mrf.mxu0
  %v714 = vadd.f32 %v610, %v713
  %v715 = vpop.f32.mrf.mxu0
  %716 = vmatprep.mubr.f32.mxu0 0.0
  %717 = vmatmul.mubr.f32.gmra.mxu0 %v584
  %v718 = vpop.f32.mrf.mxu0
  %v719 = vadd.f32 %v615, %v718
  %v720 = vpop.f32.mrf.mxu0
  %721 = vmatprep.mubr.f32.mxu0 0.0
  %722 = vmatmul.mubr.f32.gmra.mxu0 %v585
  %v723 = vpop.f32.mrf.mxu0
  %v724 = vadd.f32 %v620, %v723
  %v725 = vpop.f32.mrf.mxu0
  %726 = vmatprep.mubr.f32.mxu0 0.0
  %727 = vmatmul.mubr.f32.gmra.mxu0 %v586
  %v728 = vpop.f32.mrf.mxu0
  %v729 = vadd.f32 %v625, %v728
  %v730 = vpop.f32.mrf.mxu0
  %731 = vmatprep.mubr.f32.mxu0 0.0
  %732 = vmatmul.mubr.f32.gmra.mxu0 %v587
  %v733 = vpop.f32.mrf.mxu0
  %v734 = vadd.f32 %v630, %v733
  %v735 = vpop.f32.mrf.mxu0
  %736 = vmatprep.mubr.f32.mxu0 0.0
  %737 = vmatmul.mubr.f32.gmra.mxu0 %v588
  %v738 = vpop.f32.mrf.mxu0
  %v739 = vadd.f32 %v635, %v738
  %v740 = vpop.f32.mrf.mxu0
  %741 = vdwg.mxu0
  %v742 = vmax.f32 %v704, 0.0
  %v743 = vmax.f32 %v709, 0.0
  %v744 = vmax.f32 %v714, 0.0
  %v745 = vmax.f32 %v719, 0.0
  %v746 = vmax.f32 %v724, 0.0
  %v747 = vmax.f32 %v729, 0.0
  %v748 = vmax.f32 %v734, 0.0
  %v749 = vmax.f32 %v739, 0.0
  %v750 = vld [vmem:[%s1 + $0x110] sm:$0xff]
  %v751 = vld [vmem:[%s1 + $0x118] sm:$0xff]
  %v752 = vld [vmem:[%s2 + $0x110] sm:$0xff]
  %v753 = vld [vmem:[%s2 + $0x118] sm:$0xff]
  %755 = vset.pattern.permute.xlu0 0
  %756 = vperm.xlu0 %755, %v752
  %v757 = vpop.permute.xlu0 %756
  %760 = vset.pattern.permute.xlu0 0
  %761 = vperm.xlu0 %760, %v753
  %v762 = vpop.permute.xlu0 %761
  %v765 = vsel %vm371, %v750, 0
  %v768 = vsel %vm371, %v751, 0
  %770 = vmatprep.subr.mxu0 0.0
  %771 = vmatpush1.msra.mxu0 0.0
  %772 = vmatprep.subr.mxu0 0.0
  %773 = vmatpush1.msra.mxu0 0.0
  %774 = vmatprep.subr.mxu0 0.0
  %775 = vmatpush1.msra.mxu0 0.0
  %776 = vmatprep.subr.mxu0 0.0
  %777 = vmatpush1.msra.mxu0 0.0
  %778 = vmatprep.subr.mxu0 0.0
  %779 = vmatpush1.msra.mxu0 0.0
  %780 = vmatprep.subr.mxu0 0.0
  %781 = vmatpush1.msra.mxu0 0.0
  %782 = vmatprep.subr.mxu0 0.0
  %783 = vmatpush1.msra.mxu0 0.0
  %784 = vmatprep.subr.mxu0 0.0
  %785 = vmatpush1.msra.mxu0 0.0
  %786 = vmatprep.subr.mxu0 0.0
  %787 = vmatpush1.msra.mxu0 %v749
  %788 = vmatprep.subr.mxu0 0.0
  %789 = vmatpush1.msra.mxu0 %v748
  %790 = vmatprep.subr.mxu0 0.0
  %791 = vmatpush1.msra.mxu0 %v747
  %792 = vmatprep.subr.mxu0 0.0
  %793 = vmatpush1.msra.mxu0 %v746
  %794 = vmatprep.subr.mxu0 0.0
  %795 = vmatpush1.msra.mxu0 %v745
  %796 = vmatprep.subr.mxu0 0.0
  %797 = vmatpush1.msra.mxu0 %v744
  %798 = vmatprep.subr.mxu0 0.0
  %799 = vmatpush1.msra.mxu0 %v743
  %800 = vmatprep.subr.mxu0 0.0
  %801 = vmatpush1.msra.mxu0 %v742
  %802 = vmatprep.subr.mxu0 0.0
  %803 = vmatpush2.msra.mxu0 0.0
  %804 = vmatprep.subr.mxu0 0.0
  %805 = vmatpush2.msra.mxu0 0.0
  %806 = vmatprep.subr.mxu0 0.0
  %807 = vmatpush2.msra.mxu0 0.0
  %808 = vmatprep.subr.mxu0 0.0
  %809 = vmatpush2.msra.mxu0 0.0
  %810 = vmatprep.subr.mxu0 0.0
  %811 = vmatpush2.msra.mxu0 0.0
  %812 = vmatprep.subr.mxu0 0.0
  %813 = vmatpush2.msra.mxu0 0.0
  %814 = vmatprep.subr.mxu0 0.0
  %815 = vmatpush2.msra.mxu0 0.0
  %816 = vmatprep.subr.mxu0 0.0
  %817 = vmatpush2.msra.mxu0 0.0
  %818 = vmatprep.subr.mxu0 0.0
  %819 = vmatpush2.msra.mxu0 0.0
  %820 = vmatprep.subr.mxu0 0.0
  %821 = vmatpush2.msra.mxu0 0.0
  %822 = vmatprep.subr.mxu0 0.0
  %823 = vmatpush2.msra.mxu0 0.0
  %824 = vmatprep.subr.mxu0 0.0
  %825 = vmatpush2.msra.mxu0 0.0
  %826 = vmatprep.subr.mxu0 0.0
  %827 = vmatpush2.msra.mxu0 0.0
  %828 = vmatprep.subr.mxu0 0.0
  %829 = vmatpush2.msra.mxu0 0.0
  %830 = vmatprep.subr.mxu0 0.0
  %831 = vmatpush2.msra.mxu0 0.0
  %832 = vmatprep.subr.mxu0 0.0
  %833 = vmatpush2.msra.mxu0 0.0
  %834 = vmatprep.mubr.f32.mxu0 0.0
  %835 = vmatmul.mubr.f32.gmra.mxu0 %v765
  %v836 = vpop.f32.mrf.mxu0
  %v837 = vadd.f32 %v757, %v836
  %v838 = vpop.f32.mrf.mxu0
  %839 = vmatprep.mubr.f32.mxu0 0.0
  %840 = vmatmul.mubr.f32.gmra.mxu0 %v768
  %v841 = vpop.f32.mrf.mxu0
  %v842 = vadd.f32 %v762, %v841
  %v843 = vpop.f32.mrf.mxu0
  %844 = vdwg.mxu0
  %v845 = vmax.f32 %v837, 0.0
  %v846 = vmax.f32 %v842, 0.0
  %v847 = vld [vmem:[%s1 + $0x120] sm:$0xff]
  %v848 = vld [vmem:[%s1 + $0x128] sm:$0xff]
  %v849 = vld [vmem:[%s2 + $0x120] sm:$0x1]
  %851 = vset.pattern.permute.xlu0 0
  %852 = vperm.xlu0 %851, %v847
  %v853 = vpop.permute.xlu0 %852
  %856 = vset.pattern.permute.xlu0 0
  %857 = vperm.xlu0 %856, %v848
  %v858 = vpop.permute.xlu0 %857
  %v860 = vmul.f32 %v845, %v853
  %v861 = vmul.f32 %v846, %v858
  %v862 = vadd.f32 %v860, %v861
  %v863 = vrot.slane %v862, 4
  %v864 = vadd.f32 %v862, %v863
  %v865 = vrot.slane %v864, 2
  %v866 = vadd.f32 %v864, %v865
  %v867 = vrot.slane %v866, 1
  %v868 = vadd.f32 %v866, %v867
  %870 = vset.pattern.permute.xlu0 0
  %871 = vperm.xlu0 %870, %v849
  %v872 = vpop.permute.xlu0 %871
  %v874 = vadd.f32 %v868, %v872
  %v875 = vtanh.pop %v874
  %876 = vst [vmem:[%s3] sm:$0x1] %v875
  // Predicated region
  $region14: #{_forward_impl.1} parent=0 // pred_check
    _
  $region15: #{_forward_impl.1} parent=0 // pred_check_branch
    %878 = sbr.rel (0) target = $region17
  $region16: #{_forward_impl.1} parent=0 // pred_region
    _
  $region17: #{_forward_impl.1} parent=0 // pred_fallthru
    _
  // Predicated region
  $region18: #{_forward_impl.1} parent=0 // pred_check
    _
  $region19: #{_forward_impl.1} parent=0 // pred_check_branch
    %880 = sbr.rel (0) target = $region21
  $region20: #{_forward_impl.1} parent=0 // pred_region
    _
  $region21: #{_forward_impl.1} parent=0 // pred_fallthru
    _

</llo_original>
